<compile_context>
chip_gen: v7x
topology: tpu7x:2x2x1
jax: 0.10.0
libtpu: 0.0.40
codegen_flags: <defaults>
</compile_context>

<pallas_src>
import functools

import jax
import jax.numpy as jnp
from jax import lax
from jax.experimental import pallas as pl
from jax.experimental.pallas import tpu as pltpu


def _round_up(x, m):
    return ((x + m - 1) // m) * m


def _local_maxpool_kernel(q_xyz_ref, k_xyzt_ref, data_ref, out_ref, *,
                          local_size, n_valid):
    """One (batch, query-tile) grid step.

    q_xyz_ref : (1, TQ, C)       query coordinates (original layout)
    k_xyzt_ref: (1, C, Npad)     key coordinates, pre-transposed (lane-dense)
    data_ref  : (1, Npad, Dpad)  key features (q-invariant block, 1 DMA/batch)
    out_ref   : (1, TQ, Dpad)
    """
    q_xyz = q_xyz_ref[0].astype(jnp.float32)       # (TQ, C)
    k_xyzt = k_xyzt_ref[0].astype(jnp.float32)     # (C, Npad)
    tq = q_xyz.shape[0]
    c_dim = q_xyz.shape[1]
    n_pad = k_xyzt.shape[1]

    # Gather-matmul operands: bf16 features stay bf16 (one-hot x bf16 with f32
    # accumulation is exact and uses the fast MXU path); otherwise f32.
    if data_ref.dtype == jnp.bfloat16:
        data_mm = data_ref[0]
        sel_dtype = jnp.bfloat16
    else:
        data_mm = data_ref[0].astype(jnp.float32)
        sel_dtype = jnp.float32

    # Pairwise squared distances, per coordinate, so the self entry is an
    # exact 0.0 and is removed by the < 1e-8 masking just like the module.
    dist = jnp.zeros((tq, n_pad), jnp.float32)
    for c in range(c_dim):
        d = q_xyz[:, c:c + 1] - k_xyzt[c:c + 1, :]          # (TQ, Npad)
        dist = dist + d * d

    col = lax.broadcasted_iota(jnp.int32, (1, n_pad), 1)    # (1, Npad) row

    dist = jnp.where(dist < 1e-8, jnp.inf, dist)            # drop self/coincident
    if n_pad > n_valid:                                     # drop padded keys
        dist = jnp.where(col < n_valid, dist, jnp.inf)

    # Self feature is always included (the concatenated self_index): take the
    # query rows of the resident key-data block.
    q_start = pl.multiple_of(pl.program_id(1) * tq, 8)
    max_feat = data_ref[0, pl.ds(q_start, tq), :].astype(jnp.float32)  # (TQ, Dpad)

    # topk(largest=False) as iterative k-min selection.
    def select_one(dist, max_feat):
        min_d = jnp.min(dist, axis=-1, keepdims=True)                   # (TQ, 1)
        is_min = dist <= min_d
        argmin = jnp.min(jnp.where(is_min, col, n_pad),
                         axis=-1, keepdims=True)                        # (TQ, 1)
        sel = (col == argmin)                                           # (TQ, Npad)
        feat = jnp.dot(sel.astype(sel_dtype), data_mm,
                       preferred_element_type=jnp.float32)              # (TQ, Dpad)
        max_feat = jnp.maximum(max_feat, feat)
        dist = jnp.where(sel, jnp.inf, dist)
        return dist, max_feat

    if local_size <= 8:
        for _ in range(local_size):
            dist, max_feat = select_one(dist, max_feat)
    else:
        dist, max_feat = lax.fori_loop(
            0, local_size, lambda _, carry: select_one(*carry),
            (dist, max_feat))

    out_ref[0] = max_feat.astype(out_ref.dtype)


def _global_maxpool_kernel(data_ref, out_ref):
    # data_ref : (1, TN, D) tile of the N axis; out_ref accumulates across N.
    tile_max = jnp.max(data_ref[0], axis=0, keepdims=True)   # (1, D)

    @pl.when(pl.program_id(1) == 0)
    def _():
        out_ref[0] = tile_max

    @pl.when(pl.program_id(1) > 0)
    def _():
        out_ref[0] = jnp.maximum(out_ref[0], tile_max)


def point_max_pooling(xyz, data, local_size, is_global=False):
    """Pallas implementation of PointMaxPooling.forward((xyz, data))."""
    assert not (local_size and is_global), \
        "local_size and is_global cannot all be True"
    BS, N, C = xyz.shape
    _, _, D = data.shape

    if is_global:
        TN = min(512, _round_up(N, 8))
        N_pad = _round_up(N, TN)
        data_g = data
        if N_pad != N:
            fill = jnp.finfo(data.dtype).min
            data_g = jnp.pad(data, ((0, 0), (0, N_pad - N), (0, 0)),
                             constant_values=fill)
        pooled = pl.pallas_call(
            _global_maxpool_kernel,
            out_shape=jax.ShapeDtypeStruct((BS, 1, D), data.dtype),
            grid=(BS, N_pad // TN),
            in_specs=[pl.BlockSpec((1, TN, D), lambda b, n: (b, n, 0))],
            out_specs=pl.BlockSpec((1, 1, D), lambda b, n: (b, 0, 0)),
            compiler_params=pltpu.CompilerParams(
                dimension_semantics=("parallel", "arbitrary")),
        )(data_g)
        new_xyz = jnp.zeros((BS, 1, C), dtype=xyz.dtype)
        return new_xyz, pooled

    d_item = jnp.dtype(data.dtype).itemsize

    # Lane-dense output: pad the feature dim up to a multiple of 128.
    D_pad = _round_up(D, 128)

    # Query-row tiling: keep the ~5 live (TQ, Npad) f32 temporaries within a
    # ~16 MiB budget so the kernel fits v7x's 64 MiB VMEM per TensorCore.
    TQ = min(128, _round_up(N, 8))
    temp_budget = 16 * 2 ** 20
    max_tq = temp_budget // (20 * max(N, 1))
    TQ = min(TQ, max(8, (max_tq // 8) * 8))
    N_pad = _round_up(N, TQ)

    xyz_q = xyz
    data_p = data
    if N_pad != N:
        xyz_q = jnp.pad(xyz, ((0, 0), (0, N_pad - N), (0, 0)))
    if N_pad != N or D_pad != D:
        data_p = jnp.pad(data, ((0, 0), (0, N_pad - N), (0, D_pad - D)))
    # Key-side coordinates pre-transposed in the wrapper -> lane-dense (1, N)
    # per-coordinate rows in the kernel; no in-kernel transpose of C=3 lanes.
    xyz_kt = jnp.swapaxes(xyz_q, 1, 2)                       # (BS, C, Npad)

    kernel = functools.partial(_local_maxpool_kernel,
                               local_size=local_size, n_valid=N)

    # Rough VMEM estimate (double-buffered blocks + live temporaries), clamped
    # below v7x's 64 MiB; also lifts the 16 MiB default scoped limit on v5e.
    vmem_est = (2 * N_pad * D_pad * d_item        # key data (double-buffered)
                + 2 * C * N_pad * 4               # key xyz^T
                + 2 * TQ * C * 4                  # query xyz
                + 2 * TQ * D_pad * d_item         # output
                + N_pad * D_pad * 4               # f32 copy for gather matmul
                + 6 * TQ * N_pad * 4              # dist + selection temps
                + 4 * TQ * D_pad * 4)             # max_feat / feat
    vmem_limit = int(min(max(2 * vmem_est, 32 * 2 ** 20), 56 * 2 ** 20))

    cost = pl.CostEstimate(
        flops=2 * BS * max(local_size, 1) * N_pad * N_pad * D_pad,
        transcendentals=0,
        bytes_accessed=BS * (2 * N * C * 4 + 2 * N * D * d_item),
    )

    local_data = pl.pallas_call(
        kernel,
        out_shape=jax.ShapeDtypeStruct((BS, N_pad, D_pad), data.dtype),
        grid=(BS, N_pad // TQ),
        in_specs=[
            pl.BlockSpec((1, TQ, C), lambda b, q: (b, q, 0)),         # query xyz
            pl.BlockSpec((1, C, N_pad), lambda b, q: (b, 0, 0)),      # key xyz^T
            pl.BlockSpec((1, N_pad, D_pad), lambda b, q: (b, 0, 0)),  # key data
        ],
        out_specs=pl.BlockSpec((1, TQ, D_pad), lambda b, q: (b, q, 0)),
        compiler_params=pltpu.CompilerParams(
            dimension_semantics=("parallel", "parallel"),
            vmem_limit_bytes=vmem_limit),
        cost_estimate=cost,
    )(xyz_q, xyz_kt, data_p)

    if N_pad != N or D_pad != D:
        local_data = local_data[:, :N, :D]
    return xyz, local_data


def _reference(xyz, data, local_size, is_global=False):
    """Pure-JAX reference mirroring the PyTorch forward."""
    BS, N, C = xyz.shape
    if is_global:
        return (jnp.zeros((BS, 1, C), xyz.dtype),
                jnp.max(data, axis=1, keepdims=True))
    diff = xyz[:, :, None, :] - xyz[:, None, :, :]        # (BS, N, N, C)
    dist = jnp.sum(diff * diff, axis=-1)                  # (BS, N, N)
    dist = jnp.where(dist < 1e-8, jnp.inf, dist)
    _, idx = lax.top_k(-dist, local_size)                 # k smallest
    self_idx = jnp.broadcast_to(jnp.arange(N, dtype=idx.dtype)[None, :, None],
                                (BS, N, 1))
    idx = jnp.concatenate([self_idx, idx], axis=-1)       # (BS, N, k+1)
    local = jax.vmap(lambda d, i: d[i])(data, idx)        # (BS, N, k+1, D)
    return xyz, jnp.max(local, axis=2)


if __name__ == "__main__":
    key = jax.random.PRNGKey(0)
    k_xyz, k_data = jax.random.split(key)

    BS, N, C, D = 2, 16, 3, 32
    local_size = 4

    xyz = jax.random.normal(k_xyz, (BS, N, C), dtype=jnp.float32)
    data = jax.random.normal(k_data, (BS, N, D), dtype=jnp.float32)

    # Local (k-NN) max pooling, f32 features.
    out_xyz, out_data = point_max_pooling(xyz, data, local_size)
    jax.block_until_ready(out_data)
    ref_xyz, ref_data = _reference(xyz, data, local_size)
    assert out_xyz.shape == (BS, N, C) and out_data.shape == (BS, N, D)
    assert jnp.allclose(out_data, ref_data, atol=1e-5, rtol=1e-5), "local mismatch"
    assert jnp.allclose(out_xyz, xyz), "xyz passthrough mismatch"

    # Local, bf16 features (exercises the bf16 MXU gather path).
    data_bf16 = data.astype(jnp.bfloat16)
    _, out_bf16 = point_max_pooling(xyz, data_bf16, local_size)
    jax.block_until_ready(out_bf16)
    _, ref_bf16 = _reference(xyz, data_bf16, local_size)
    assert out_bf16.dtype == jnp.bfloat16
    assert jnp.allclose(out_bf16.astype(jnp.float32),
                        ref_bf16.astype(jnp.float32),
                        atol=1e-2, rtol=1e-2), "bf16 local mismatch"

    # Global max pooling.
    g_xyz, g_data = point_max_pooling(xyz, data, 0, is_global=True)
    jax.block_until_ready(g_data)
    assert g_xyz.shape == (BS, 1, C) and g_data.shape == (BS, 1, D)
    assert jnp.allclose(g_data, jnp.max(data, axis=1, keepdims=True)), "global mismatch"
    assert jnp.allclose(g_xyz, jnp.zeros((BS, 1, C), xyz.dtype))

    print("KERNEL_OK")
</pallas_src>

<mosaic_0001>
module attributes {stable_mosaic.version = 11 : i64} {
  func.func @_local_maxpool_kernel(%arg0: i32, %arg1: i32, %arg2: memref<1x16x3xf32, #tpu.memory_space<vmem>>, %arg3: memref<1x3x16xf32, #tpu.memory_space<vmem>>, %arg4: memref<1x16x128xf32, #tpu.memory_space<vmem>>, %arg5: memref<1x16x128xf32, #tpu.memory_space<vmem>>) attributes {dimension_semantics = [#tpu.dimension_semantics<parallel>, #tpu.dimension_semantics<parallel>], iteration_bounds = array<i64: 2, 1>, scalar_prefetch = 0 : i64, scratch_operands = 0 : i64, tpu.core_type = #tpu.core_type<tc>, window_params = [{transform_indices = @transform_0, window_bounds = array<i64: 1, 16, 3>}, {transform_indices = @transform_1, window_bounds = array<i64: 1, 3, 16>}, {transform_indices = @transform_2, window_bounds = array<i64: 1, 16, 128>}, {transform_indices = @transform_3, window_bounds = array<i64: 1, 16, 128>}]} {
    %c0 = arith.constant 0 : index
    %c0_0 = arith.constant 0 : index
    %c0_1 = arith.constant 0 : index
    %0 = vector.load %arg2[%c0, %c0_0, %c0_1] : memref<1x16x3xf32, #tpu.memory_space<vmem>>, vector<1x16x3xf32>
    %1 = vector.shape_cast %0 : vector<1x16x3xf32> to vector<16x3xf32>
    %c0_2 = arith.constant 0 : index
    %c0_3 = arith.constant 0 : index
    %c0_4 = arith.constant 0 : index
    %2 = vector.load %arg3[%c0_2, %c0_3, %c0_4] : memref<1x3x16xf32, #tpu.memory_space<vmem>>, vector<1x3x16xf32>
    %3 = vector.shape_cast %2 : vector<1x3x16xf32> to vector<3x16xf32>
    %c0_5 = arith.constant 0 : index
    %c0_6 = arith.constant 0 : index
    %c0_7 = arith.constant 0 : index
    %4 = vector.load %arg4[%c0_5, %c0_6, %c0_7] : memref<1x16x128xf32, #tpu.memory_space<vmem>>, vector<1x16x128xf32>
    %5 = vector.shape_cast %4 : vector<1x16x128xf32> to vector<16x128xf32>
    %cst = arith.constant 0.000000e+00 : f32
    %6 = vector.broadcast %cst : f32 to vector<16x16xf32>
    %7 = vector.extract_strided_slice %1 {offsets = [0, 0], sizes = [16, 1], strides = [1, 1]} : vector<16x3xf32> to vector<16x1xf32>
    %8 = vector.extract_strided_slice %3 {offsets = [0, 0], sizes = [1, 16], strides = [1, 1]} : vector<3x16xf32> to vector<1x16xf32>
    %9 = vector.broadcast %7 : vector<16x1xf32> to vector<16x16xf32>
    %10 = vector.broadcast %8 : vector<1x16xf32> to vector<16x16xf32>
    %11 = arith.subf %9, %10 : vector<16x16xf32>
    %12 = arith.mulf %11, %11 : vector<16x16xf32>
    %13 = arith.addf %6, %12 : vector<16x16xf32>
    %14 = vector.extract_strided_slice %1 {offsets = [0, 1], sizes = [16, 1], strides = [1, 1]} : vector<16x3xf32> to vector<16x1xf32>
    %15 = vector.extract_strided_slice %3 {offsets = [1, 0], sizes = [1, 16], strides = [1, 1]} : vector<3x16xf32> to vector<1x16xf32>
    %16 = vector.broadcast %14 : vector<16x1xf32> to vector<16x16xf32>
    %17 = vector.broadcast %15 : vector<1x16xf32> to vector<16x16xf32>
    %18 = arith.subf %16, %17 : vector<16x16xf32>
    %19 = arith.mulf %18, %18 : vector<16x16xf32>
    %20 = arith.addf %13, %19 : vector<16x16xf32>
    %21 = vector.extract_strided_slice %1 {offsets = [0, 2], sizes = [16, 1], strides = [1, 1]} : vector<16x3xf32> to vector<16x1xf32>
    %22 = vector.extract_strided_slice %3 {offsets = [2, 0], sizes = [1, 16], strides = [1, 1]} : vector<3x16xf32> to vector<1x16xf32>
    %23 = vector.broadcast %21 : vector<16x1xf32> to vector<16x16xf32>
    %24 = vector.broadcast %22 : vector<1x16xf32> to vector<16x16xf32>
    %25 = arith.subf %23, %24 : vector<16x16xf32>
    %26 = arith.mulf %25, %25 : vector<16x16xf32>
    %27 = arith.addf %20, %26 : vector<16x16xf32>
    %28 = tpu.iota {dimensions = array<i32: 1>} : vector<1x16xi32>
    %cst_8 = arith.constant 9.99999993E-9 : f32
    %29 = vector.broadcast %cst_8 : f32 to vector<16x16xf32>
    %30 = arith.cmpf olt, %27, %29 : vector<16x16xf32>
    %cst_9 = arith.constant 0x7F800000 : f32
    %31 = vector.broadcast %cst_9 : f32 to vector<16x16xf32>
    %32 = arith.select %30, %31, %27 : vector<16x16xi1>, vector<16x16xf32>
    %c16_i32 = arith.constant 16 : i32
    %33 = arith.muli %arg1, %c16_i32 : i32
    %34 = tpu.assume_multiple %33, 8 : i32
    %c0_10 = arith.constant 0 : index
    %35 = arith.index_cast %34 : i32 to index
    %c0_11 = arith.constant 0 : index
    %36 = vector.load %arg4[%c0_10, %35, %c0_11] : memref<1x16x128xf32, #tpu.memory_space<vmem>>, vector<1x16x128xf32>
    %37 = vector.shape_cast %36 : vector<1x16x128xf32> to vector<16x128xf32>
    %cst_12 = arith.constant dense<0x7F800000> : vector<16xf32>
    %38 = vector.multi_reduction <minimumf>, %32, %cst_12 [1] : vector<16x16xf32> to vector<16xf32>
    %39 = vector.shape_cast %38 : vector<16xf32> to vector<16x1xf32>
    %40 = vector.broadcast %39 : vector<16x1xf32> to vector<16x16xf32>
    %41 = arith.cmpf ole, %32, %40 : vector<16x16xf32>
    %c16_i32_13 = arith.constant 16 : i32
    %42 = vector.shape_cast %28 : vector<1x16xi32> to vector<1x16xi32>
    %43 = vector.broadcast %42 : vector<1x16xi32> to vector<16x16xi32>
    %44 = vector.broadcast %c16_i32_13 : i32 to vector<16x16xi32>
    %45 = arith.select %41, %43, %44 : vector<16x16xi1>, vector<16x16xi32>
    %cst_14 = arith.constant dense<2147483647> : vector<16xi32>
    %46 = vector.multi_reduction <minsi>, %45, %cst_14 [1] : vector<16x16xi32> to vector<16xi32>
    %47 = vector.shape_cast %46 : vector<16xi32> to vector<16x1xi32>
    %48 = vector.broadcast %28 : vector<1x16xi32> to vector<16x16xi32>
    %49 = vector.broadcast %47 : vector<16x1xi32> to vector<16x16xi32>
    %50 = arith.cmpi eq, %48, %49 : vector<16x16xi32>
    %51 = arith.extui %50 : vector<16x16xi1> to vector<16x16xi32>
    %52 = arith.sitofp %51 : vector<16x16xi32> to vector<16x16xf32>
    %cst_15 = arith.constant dense<0.000000e+00> : vector<16x128xf32>
    %53 = tpu.matmul %52, %5, %cst_15 {dimension_numbers = #tpu.dot_dimension_numbers<[1], [0], [0], [1], [0, 0, 1, 1], [], []>} : vector<16x16xf32>, vector<16x128xf32>, vector<16x128xf32> -> vector<16x128xf32>
    %54 = arith.maximumf %37, %53 : vector<16x128xf32>
    %cst_16 = arith.constant 0x7F800000 : f32
    %55 = vector.broadcast %cst_16 : f32 to vector<16x16xf32>
    %56 = arith.select %50, %55, %32 : vector<16x16xi1>, vector<16x16xf32>
    %cst_17 = arith.constant dense<0x7F800000> : vector<16xf32>
    %57 = vector.multi_reduction <minimumf>, %56, %cst_17 [1] : vector<16x16xf32> to vector<16xf32>
    %58 = vector.shape_cast %57 : vector<16xf32> to vector<16x1xf32>
    %59 = vector.broadcast %58 : vector<16x1xf32> to vector<16x16xf32>
    %60 = arith.cmpf ole, %56, %59 : vector<16x16xf32>
    %c16_i32_18 = arith.constant 16 : i32
    %61 = vector.shape_cast %28 : vector<1x16xi32> to vector<1x16xi32>
    %62 = vector.broadcast %61 : vector<1x16xi32> to vector<16x16xi32>
    %63 = vector.broadcast %c16_i32_18 : i32 to vector<16x16xi32>
    %64 = arith.select %60, %62, %63 : vector<16x16xi1>, vector<16x16xi32>
    %cst_19 = arith.constant dense<2147483647> : vector<16xi32>
    %65 = vector.multi_reduction <minsi>, %64, %cst_19 [1] : vector<16x16xi32> to vector<16xi32>
    %66 = vector.shape_cast %65 : vector<16xi32> to vector<16x1xi32>
    %67 = vector.broadcast %28 : vector<1x16xi32> to vector<16x16xi32>
    %68 = vector.broadcast %66 : vector<16x1xi32> to vector<16x16xi32>
    %69 = arith.cmpi eq, %67, %68 : vector<16x16xi32>
    %70 = arith.extui %69 : vector<16x16xi1> to vector<16x16xi32>
    %71 = arith.sitofp %70 : vector<16x16xi32> to vector<16x16xf32>
    %cst_20 = arith.constant dense<0.000000e+00> : vector<16x128xf32>
    %72 = tpu.matmul %71, %5, %cst_20 {dimension_numbers = #tpu.dot_dimension_numbers<[1], [0], [0], [1], [0, 0, 1, 1], [], []>} : vector<16x16xf32>, vector<16x128xf32>, vector<16x128xf32> -> vector<16x128xf32>
    %73 = arith.maximumf %54, %72 : vector<16x128xf32>
    %cst_21 = arith.constant 0x7F800000 : f32
    %74 = vector.broadcast %cst_21 : f32 to vector<16x16xf32>
    %75 = arith.select %69, %74, %56 : vector<16x16xi1>, vector<16x16xf32>
    %cst_22 = arith.constant dense<0x7F800000> : vector<16xf32>
    %76 = vector.multi_reduction <minimumf>, %75, %cst_22 [1] : vector<16x16xf32> to vector<16xf32>
    %77 = vector.shape_cast %76 : vector<16xf32> to vector<16x1xf32>
    %78 = vector.broadcast %77 : vector<16x1xf32> to vector<16x16xf32>
    %79 = arith.cmpf ole, %75, %78 : vector<16x16xf32>
    %c16_i32_23 = arith.constant 16 : i32
    %80 = vector.shape_cast %28 : vector<1x16xi32> to vector<1x16xi32>
    %81 = vector.broadcast %80 : vector<1x16xi32> to vector<16x16xi32>
    %82 = vector.broadcast %c16_i32_23 : i32 to vector<16x16xi32>
    %83 = arith.select %79, %81, %82 : vector<16x16xi1>, vector<16x16xi32>
    %cst_24 = arith.constant dense<2147483647> : vector<16xi32>
    %84 = vector.multi_reduction <minsi>, %83, %cst_24 [1] : vector<16x16xi32> to vector<16xi32>
    %85 = vector.shape_cast %84 : vector<16xi32> to vector<16x1xi32>
    %86 = vector.broadcast %28 : vector<1x16xi32> to vector<16x16xi32>
    %87 = vector.broadcast %85 : vector<16x1xi32> to vector<16x16xi32>
    %88 = arith.cmpi eq, %86, %87 : vector<16x16xi32>
    %89 = arith.extui %88 : vector<16x16xi1> to vector<16x16xi32>
    %90 = arith.sitofp %89 : vector<16x16xi32> to vector<16x16xf32>
    %cst_25 = arith.constant dense<0.000000e+00> : vector<16x128xf32>
    %91 = tpu.matmul %90, %5, %cst_25 {dimension_numbers = #tpu.dot_dimension_numbers<[1], [0], [0], [1], [0, 0, 1, 1], [], []>} : vector<16x16xf32>, vector<16x128xf32>, vector<16x128xf32> -> vector<16x128xf32>
    %92 = arith.maximumf %73, %91 : vector<16x128xf32>
    %cst_26 = arith.constant 0x7F800000 : f32
    %93 = vector.broadcast %cst_26 : f32 to vector<16x16xf32>
    %94 = arith.select %88, %93, %75 : vector<16x16xi1>, vector<16x16xf32>
    %cst_27 = arith.constant dense<0x7F800000> : vector<16xf32>
    %95 = vector.multi_reduction <minimumf>, %94, %cst_27 [1] : vector<16x16xf32> to vector<16xf32>
    %96 = vector.shape_cast %95 : vector<16xf32> to vector<16x1xf32>
    %97 = vector.broadcast %96 : vector<16x1xf32> to vector<16x16xf32>
    %98 = arith.cmpf ole, %94, %97 : vector<16x16xf32>
    %c16_i32_28 = arith.constant 16 : i32
    %99 = vector.shape_cast %28 : vector<1x16xi32> to vector<1x16xi32>
    %100 = vector.broadcast %99 : vector<1x16xi32> to vector<16x16xi32>
    %101 = vector.broadcast %c16_i32_28 : i32 to vector<16x16xi32>
    %102 = arith.select %98, %100, %101 : vector<16x16xi1>, vector<16x16xi32>
    %cst_29 = arith.constant dense<2147483647> : vector<16xi32>
    %103 = vector.multi_reduction <minsi>, %102, %cst_29 [1] : vector<16x16xi32> to vector<16xi32>
    %104 = vector.shape_cast %103 : vector<16xi32> to vector<16x1xi32>
    %105 = vector.broadcast %28 : vector<1x16xi32> to vector<16x16xi32>
    %106 = vector.broadcast %104 : vector<16x1xi32> to vector<16x16xi32>
    %107 = arith.cmpi eq, %105, %106 : vector<16x16xi32>
    %108 = arith.extui %107 : vector<16x16xi1> to vector<16x16xi32>
    %109 = arith.sitofp %108 : vector<16x16xi32> to vector<16x16xf32>
    %cst_30 = arith.constant dense<0.000000e+00> : vector<16x128xf32>
    %110 = tpu.matmul %109, %5, %cst_30 {dimension_numbers = #tpu.dot_dimension_numbers<[1], [0], [0], [1], [0, 0, 1, 1], [], []>} : vector<16x16xf32>, vector<16x128xf32>, vector<16x128xf32> -> vector<16x128xf32>
    %111 = arith.maximumf %92, %110 : vector<16x128xf32>
    %c0_31 = arith.constant 0 : index
    %c0_32 = arith.constant 0 : index
    %c0_33 = arith.constant 0 : index
    %112 = vector.load %arg5[%c0_31, %c0_32, %c0_33] : memref<1x16x128xf32, #tpu.memory_space<vmem>>, vector<1x16x128xf32>
    %113 = vector.shape_cast %112 : vector<1x16x128xf32> to vector<16x128xf32>
    %114 = vector.shape_cast %111 : vector<16x128xf32> to vector<1x16x128xf32>
    tpu.vector_store %arg5[%c0_31, %c0_32, %c0_33], %114 {strides = array<i32>} : memref<1x16x128xf32, #tpu.memory_space<vmem>>, vector<1x16x128xf32>,
    return
  }
  func.func @transform_0(%arg0: i32, %arg1: i32) -> (i32, i32, i32) {
    %c0_i32 = arith.constant 0 : i32
    %c0_i32_0 = arith.constant 0 : i32
    return %arg0, %arg1, %c0_i32 : i32, i32, i32
  }
  func.func @transform_1(%arg0: i32, %arg1: i32) -> (i32, i32, i32) {
    %c0_i32 = arith.constant 0 : i32
    %c0_i32_0 = arith.constant 0 : i32
    %c0_i32_1 = arith.constant 0 : i32
    return %arg0, %c0_i32, %c0_i32_0 : i32, i32, i32
  }
  func.func @transform_2(%arg0: i32, %arg1: i32) -> (i32, i32, i32) {
    %c0_i32 = arith.constant 0 : i32
    %c0_i32_0 = arith.constant 0 : i32
    %c0_i32_1 = arith.constant 0 : i32
    return %arg0, %c0_i32, %c0_i32_0 : i32, i32, i32
  }
  func.func @transform_3(%arg0: i32, %arg1: i32) -> (i32, i32, i32) {
    %c0_i32 = arith.constant 0 : i32
    %c0_i32_0 = arith.constant 0 : i32
    return %arg0, %arg1, %c0_i32 : i32, i32, i32
  }
}

</mosaic_0001>

<llo_original>
// kernel: tpu_custom_call.1
$region0: #{tpu_custom_call.1}
  #allocation0 [shape = 'u32[]', space=smem, size = 0x4, offset = 0x4, fixed_abs, tag = 'smem constant byte address 0x4 - core index']
  #allocation1 [shape = 'u32[144,128]{1,0:T(1,128)}', space=vmem, size = 0x12000, scoped, tag = 'internal scratch']
  %s0 = inlined_call_operand.vmem [shape: f32[2,16,3], index: 0, kind: input, shape index: {}]
  %s1 = inlined_call_operand.vmem [shape: f32[2,3,16], index: 1, kind: input, shape index: {}]
  %s2 = inlined_call_operand.vmem [shape: f32[2,16,128], index: 2, kind: input, shape index: {}]
  %s3 = inlined_call_operand.hbm [shape: f32[2,16,128], index: 3, kind: output, shape index: {}]
  %s4 = sld [smem:[#allocation0]]
  $region45: #{tpu_custom_call.1} parent=0
    _
  %s6 = ssub.s32 1, %s4
  %s7 = scalar_select 0, %s6, %s4
  $region1: #{tpu_custom_call.1} parent=0
    #allocation2 [shape = 'u8[16384]{0}', space=vmem, size = 0x4000, scoped, tag = 'output window, operand 0']
    #allocation3 [shape = 's32[2]{0}', space=sflag, size = 0x8, scoped, tag = 'scoped memory for tpu_custom_call.1']
    %8 = vsyncpa [#allocation3], 0
    %s9 = scalar_lea.sflag [#allocation3], 1
    %10 = vsyncpa %s9, 0
    loop: start=0, step=1, limit=4
    $region2: #{tpu_custom_call.1} parent=1 // loop_pre_header
      _
    $region3: #{tpu_custom_call.1} parent=1 // loop_header
      %s12 = sphi 0, %s16
      %p13 = scmp.ge.s32.totalorder %s12, 4
      %s19 = sphi 0, %s31
      %s20 = sphi 0, %s27
      %s21 = sphi 0, %s19
      %s22 = sphi 0, %s20
      %s23 = sphi 0, %s21
      %s24 = sphi 0, %s22
      %s36 = sphi 0, %s38
      %s39 = sphi 0, %s36
      %s40 = sphi 0, %s39
      %s56 = sphi 0, %s40
      %s62 = sphi 0, %s64
      %s65 = sphi 0, %s62
      %s66 = sphi 0, %s65
      %s82 = sphi 0, %s66
      %s88 = sphi 0, %s90
      %s91 = sphi 0, %s88
      %s92 = sphi 0, %s91
      %s108 = sphi 0, %s92
      %s116 = sphi 0, %s118
      %s119 = sphi 0, %s116
      %s120 = sphi 0, %s119
      %s136 = sphi 0, %s120
    $region4: #{tpu_custom_call.1} parent=1 // loop_header_branch
      %15 = sbr.rel (%p13) target = $region8
    $region5: #{tpu_custom_call.1} parent=1 // loop_body
      %s17 = ssub.s32 %s12, 1
      %s18 = ssub.s32 %s12, 2
      %s25 = sadd.s32 1, %s20
      %p26 = scmp.ge.s32.totalorder %s25, 1
      %s27 = scalar_select %p26, 0, %s25
      %s28 = sadd.s32 1, %s19
      %s29 = scalar_select %p26, %s28, %s19
      %p30 = scmp.ge.s32.totalorder %s29, 2
      %s31 = scalar_select %p30, 0, %s29
      %s32 = ssub.s32 %s19, %s31
      %s33 = ssub.s32 %s20, %s27
      %s34 = sor.u32 %s32, %s33
      %p35 = scmp.eq.s32.totalorder %s34, 0
      %s37 = sadd.s32 %s36, 1
      %s38 = scalar_select %p35, %s36, %s37
      %p41 = pneg %p35
      %p42 = scmp.eq.s32.totalorder %s12, 1
      %p43 = por %p41, %p42
      %p44 = scmp.ne.s32.totalorder %s36, %s39
      %p45 = scmp.eq.s32.totalorder %s12, 0
      %p46 = por %p44, %p45
      %p47 = scmp.ne.s32.totalorder %s36, %s39
      %p48 = scmp.eq.s32.totalorder %s17, 1
      %p49 = por %p47, %p48
      %p50 = scmp.ne.s32.totalorder %s39, %s40
      %p51 = scmp.eq.s32.totalorder %s17, 0
      %p52 = por %p50, %p51
      %p53 = scmp.ne.s32.totalorder %s39, %s40
      %p54 = scmp.eq.s32.totalorder %s18, 1
      %p55 = por %p53, %p54
      %p57 = scmp.ne.s32.totalorder %s40, %s56
      %p58 = scmp.eq.s32.totalorder %s18, 0
      %p59 = por %p57, %p58
      %s60 = ssub.s32 %s19, %s31
      %p61 = scmp.eq.s32.totalorder %s60, 0
      %s63 = sadd.s32 %s62, 1
      %s64 = scalar_select %p61, %s62, %s63
      %p67 = pneg %p61
      %p68 = scmp.eq.s32.totalorder %s12, 1
      %p69 = por %p67, %p68
      %p70 = scmp.ne.s32.totalorder %s62, %s65
      %p71 = scmp.eq.s32.totalorder %s12, 0
      %p72 = por %p70, %p71
      %p73 = scmp.ne.s32.totalorder %s62, %s65
      %p74 = scmp.eq.s32.totalorder %s17, 1
      %p75 = por %p73, %p74
      %p76 = scmp.ne.s32.totalorder %s65, %s66
      %p77 = scmp.eq.s32.totalorder %s17, 0
      %p78 = por %p76, %p77
      %p79 = scmp.ne.s32.totalorder %s65, %s66
      %p80 = scmp.eq.s32.totalorder %s18, 1
      %p81 = por %p79, %p80
      %p83 = scmp.ne.s32.totalorder %s66, %s82
      %p84 = scmp.eq.s32.totalorder %s18, 0
      %p85 = por %p83, %p84
      %s86 = ssub.s32 %s19, %s31
      %p87 = scmp.eq.s32.totalorder %s86, 0
      %s89 = sadd.s32 %s88, 1
      %s90 = scalar_select %p87, %s88, %s89
      %p93 = pneg %p87
      %p94 = scmp.eq.s32.totalorder %s12, 1
      %p95 = por %p93, %p94
      %p96 = scmp.ne.s32.totalorder %s88, %s91
      %p97 = scmp.eq.s32.totalorder %s12, 0
      %p98 = por %p96, %p97
      %p99 = scmp.ne.s32.totalorder %s88, %s91
      %p100 = scmp.eq.s32.totalorder %s17, 1
      %p101 = por %p99, %p100
      %p102 = scmp.ne.s32.totalorder %s91, %s92
      %p103 = scmp.eq.s32.totalorder %s17, 0
      %p104 = por %p102, %p103
      %p105 = scmp.ne.s32.totalorder %s91, %s92
      %p106 = scmp.eq.s32.totalorder %s18, 1
      %p107 = por %p105, %p106
      %p109 = scmp.ne.s32.totalorder %s92, %s108
      %p110 = scmp.eq.s32.totalorder %s18, 0
      %p111 = por %p109, %p110
      %s112 = ssub.s32 %s19, %s31
      %s113 = ssub.s32 %s20, %s27
      %s114 = sor.u32 %s112, %s113
      %p115 = scmp.eq.s32.totalorder %s114, 0
      %s117 = sadd.s32 %s116, 1
      %s118 = scalar_select %p115, %s116, %s117
      %p121 = pneg %p115
      %p122 = scmp.eq.s32.totalorder %s12, 1
      %p123 = por %p121, %p122
      %p124 = scmp.ne.s32.totalorder %s116, %s119
      %p125 = scmp.eq.s32.totalorder %s12, 0
      %p126 = por %p124, %p125
      %p127 = scmp.ne.s32.totalorder %s116, %s119
      %p128 = scmp.eq.s32.totalorder %s17, 1
      %p129 = por %p127, %p128
      %p130 = scmp.ne.s32.totalorder %s119, %s120
      %p131 = scmp.eq.s32.totalorder %s17, 0
      %p132 = por %p130, %p131
      %p133 = scmp.ne.s32.totalorder %s119, %s120
      %p134 = scmp.eq.s32.totalorder %s18, 1
      %p135 = por %p133, %p134
      %p137 = scmp.ne.s32.totalorder %s120, %s136
      %p138 = scmp.eq.s32.totalorder %s18, 0
      %p139 = por %p137, %p138
      %p140 = scmp.le.s32.totalorder 1, %s12
      %p141 = scmp.lt.s32.totalorder %s12, 3
      %p142 = pnand %p140, %p141
      %p143 = pneg %p142
      // Predicated region
      $region9: #{tpu_custom_call.1} parent=5 // pred_check
        _
      $region10: #{tpu_custom_call.1} parent=5 // pred_check_branch
        %145 = sbr.rel (%p142) target = $region12
      $region11: #{tpu_custom_call.1} parent=5 // pred_region
        %s146 = ssub.s32 %s12, 1
      $region12: #{tpu_custom_call.1} parent=5 // pred_fallthru
        _
      %p147 = scmp.lt.s32.totalorder %s12, 2
      // Predicated region
      $region13: #{tpu_custom_call.1} parent=5 // pred_check
        %p148 = pneg %p147
      $region14: #{tpu_custom_call.1} parent=5 // pred_check_branch
        %150 = sbr.rel (%p148) target = $region16
      $region15: #{tpu_custom_call.1} parent=5 // pred_region
        // Predicated region
        $region17: #{tpu_custom_call.1} parent=15 // pred_check
          %p151 = pneg %p46
        $region18: #{tpu_custom_call.1} parent=15 // pred_check_branch
          %153 = sbr.rel (%p151) target = $region20
        $region19: #{tpu_custom_call.1} parent=15 // pred_region
          %s154 = smul.u32 2, %s20
          %p155 = scmp.lt.s32.totalorder %s19, 1
          %s156 = scalar_select %p155, %s19, 1
          %p157 = scmp.lt.s32.totalorder %s154, 1
          %s158 = scalar_select %p157, %s154, 1
          %s159 = smul.addr %s156, 2
          %s160 = sadd.s32 %s158, %s159
          %s161 = smul.addr %s160, 8
          %s162 = scalar_lea.vmem %s0, %s161
          %s163 = smul.u32 2, %s20
        $region20: #{tpu_custom_call.1} parent=15 // pred_fallthru
          _
        // Predicated region
        $region21: #{tpu_custom_call.1} parent=15 // pred_check
          %p164 = pneg %p72
        $region22: #{tpu_custom_call.1} parent=15 // pred_check_branch
          %166 = sbr.rel (%p164) target = $region24
        $region23: #{tpu_custom_call.1} parent=15 // pred_region
          %p167 = scmp.lt.s32.totalorder %s19, 1
          %s168 = scalar_select %p167, %s19, 1
          %s169 = smul.addr %s168, 4
          %s170 = scalar_lea.vmem %s1, %s169
        $region24: #{tpu_custom_call.1} parent=15 // pred_fallthru
          _
        // Predicated region
        $region25: #{tpu_custom_call.1} parent=15 // pred_check
          %p171 = pneg %p98
        $region26: #{tpu_custom_call.1} parent=15 // pred_check_branch
          %173 = sbr.rel (%p171) target = $region28
        $region27: #{tpu_custom_call.1} parent=15 // pred_region
          %p174 = scmp.lt.s32.totalorder %s19, 1
          %s175 = scalar_select %p174, %s19, 1
          %s176 = smul.addr %s175, 2
          %s177 = smul.addr %s176, 8
          %s178 = scalar_lea.vmem %s2, %s177
        $region28: #{tpu_custom_call.1} parent=15 // pred_fallthru
          _
      $region16: #{tpu_custom_call.1} parent=5 // pred_fallthru
        _
      %p179 = scmp.le.s32.totalorder 1, %s12
      %p180 = scmp.lt.s32.totalorder %s12, 3
      %p181 = pnand %p179, %p180
      %p182 = pneg %p181
      // Predicated region
      $region29: #{tpu_custom_call.1} parent=5 // pred_check
        _
      $region30: #{tpu_custom_call.1} parent=5 // pred_check_branch
        %184 = sbr.rel (%p181) target = $region32
      $region31: #{tpu_custom_call.1} parent=5 // pred_region
        %s185 = ssub.s32 %s12, 1
        %s186 = smul.u32 2, %s22
        %p187 = scmp.lt.s32.totalorder %s21, 1
        %s188 = scalar_select %p187, %s21, 1
        %p189 = scmp.lt.s32.totalorder %s186, 1
        %s190 = scalar_select %p189, %s186, 1
        %s191 = smul.addr %s188, 2
        %s192 = sadd.s32 %s190, %s191
        %s193 = smul.addr %s192, 8
        %s194 = scalar_lea.vmem %s0, %s193
        %p195 = pneg %p52
        %p196 = pneg %p49
        %p197 = scmp.lt.s32.totalorder %s21, 1
        %s198 = scalar_select %p197, %s21, 1
        %s199 = smul.addr %s198, 4
        %s200 = scalar_lea.vmem %s1, %s199
        %p201 = pneg %p78
        %p202 = pneg %p75
        %p203 = scmp.lt.s32.totalorder %s21, 1
        %s204 = scalar_select %p203, %s21, 1
        %s205 = smul.addr %s204, 2
        %s206 = smul.addr %s205, 8
        %s207 = scalar_lea.vmem %s2, %s206
        %p208 = pneg %p104
        %p209 = pneg %p101
        %p210 = pneg %p132
        %p211 = pneg %p129
        %s212 = sand.u32 %s119, 1
        %s213 = scalar_lea.sflag [#allocation3], %s212
        %s214 = sand.u32 %s119, 1
        %s215 = smul.addr %s214, 16
        %s216 = scalar_lea.vmem [#allocation2], %s215
        %s217 = smul.u32 2, %s22
        %p218 = scmp.lt.s32.totalorder %s21, 1
        %s219 = scalar_select %p218, %s21, 1
        %p220 = scmp.lt.s32.totalorder %s217, 1
        %s221 = scalar_select %p220, %s217, 1
        %s222 = smul.addr %s219, 2
        %s223 = sadd.s32 %s221, %s222
        %s224 = smul.addr %s223, 8
        %s225 = scalar_lea.vmem %s0, %s224
        %s226 = smul.u32 2, %s22
        %p227 = scmp.lt.s32.totalorder %s21, 1
        %s228 = scalar_select %p227, %s21, 1
        %s229 = smul.addr %s228, 4
        %s230 = scalar_lea.vmem %s1, %s229
        %p231 = scmp.lt.s32.totalorder %s21, 1
        %s232 = scalar_select %p231, %s21, 1
        %s233 = smul.addr %s232, 2
        %s234 = smul.addr %s233, 8
        %s235 = scalar_lea.vmem %s2, %s234
        %s236 = smul.u32 2, %s22
        %v237 = vld [vmem:[%s225] sm:$0xff]
        %v238 = vld [vmem:[%s225 + $0x8] sm:$0xff]
        %v239 = vld [vmem:[%s230] sm:$0x7]
        %v240 = vld [vmem:[%s235] sm:$0xff]
        %v241 = vld [vmem:[%s235 + $0x8] sm:$0xff]
        %243 = vset.pattern.permute.xlu0 0
        %244 = vperm.xlu0 %243, %v237
        %v245 = vpop.permute.xlu0 %244
        %248 = vset.pattern.permute.xlu0 0
        %249 = vperm.xlu0 %248, %v238
        %v250 = vpop.permute.xlu0 %249
        %v252 = vlaneseq
        %v253 = vshrl.u32 %v252, 7
        %v254 = vsub.s32 0, %v253
        %v255 = vrot.slane %v239, %v254
        %v256 = vsub.f32 %v245, %v255
        %v257 = vsub.f32 %v250, %v255
        %v258 = vmul.f32 %v256, %v256
        %v259 = vmul.f32 %v257, %v257
        %v260 = vadd.f32 %v258, 0.0
        %v261 = vadd.f32 %v259, 0.0
        %262 = vset.pattern.permute.xlu0 1
        %263 = vperm.xlu0 %262, %v237
        %v264 = vpop.permute.xlu0 %263
        %266 = vset.pattern.permute.xlu0 1
        %267 = vperm.xlu0 %266, %v238
        %v268 = vpop.permute.xlu0 %267
        %v270 = vlaneseq
        %v271 = vshrl.u32 %v270, 7
        %v272 = vsub.s32 1, %v271
        %v273 = vrot.slane %v239, %v272
        %v274 = vsub.f32 %v264, %v273
        %v275 = vsub.f32 %v268, %v273
        %v276 = vmul.f32 %v274, %v274
        %v277 = vmul.f32 %v275, %v275
        %v278 = vadd.f32 %v260, %v276
        %v279 = vadd.f32 %v261, %v277
        %280 = vset.pattern.permute.xlu0 2
        %281 = vperm.xlu0 %280, %v237
        %v282 = vpop.permute.xlu0 %281
        %284 = vset.pattern.permute.xlu0 2
        %285 = vperm.xlu0 %284, %v238
        %v286 = vpop.permute.xlu0 %285
        %v288 = vlaneseq
        %v289 = vshrl.u32 %v288, 7
        %v290 = vsub.s32 2, %v289
        %v291 = vrot.slane %v239, %v290
        %v292 = vsub.f32 %v282, %v291
        %v293 = vsub.f32 %v286, %v291
        %v294 = vmul.f32 %v292, %v292
        %v295 = vmul.f32 %v293, %v293
        %v296 = vadd.f32 %v278, %v294
        %v297 = vadd.f32 %v279, %v295
        %v298 = vlaneseq
        %v299 = vand.u32 %v298, 127
        %vm300 = vcmp.lt.f32.partialorder %v296, 1e-08
        %vm301 = vcmp.lt.f32.partialorder %v297, 1e-08
        %v302 = vsel %vm300, inf, %v296
        %v303 = vsel %vm301, inf, %v297
        %s304 = smul.u32 %s22, 16
        %s305 = scalar_lea.vmem %s235, %s304
        %v306 = vld [vmem:[%s305] sm:$0xff]
        %v307 = vld [vmem:[%s305 + $0x8] sm:$0xff]
        %vm308 = vcmask 130048
        %v309 = vsel %vm308, %v302, inf
        %310 = vmin.xlane.f32.xlu0 %v309
        %v311 = vpop.xlane.xlu0 %310
        %v312 = vsel %vm308, %v303, inf
        %313 = vmin.xlane.f32.xlu0 %v312
        %v314 = vpop.xlane.xlu0 %313
        %vm315 = vcmp.le.f32.partialorder %v302, %v311
        %vm316 = vcmp.le.f32.partialorder %v303, %v314
        %v317 = vsel %vm315, %v299, 16
        %v318 = vsel %vm316, %v299, 16
        %v319 = vsel %vm308, %v317, 2147483647
        %v320 = vand.u32 %v319, 65535
        %v321 = vshra.s32 %v319, 16
        %v322 = vcvt.s32.f32 %v320
        %v323 = vcvt.s32.f32 %v321
        %324 = vmin.xlane.f32.xlu0 %v323
        %v325 = vpop.xlane.xlu0 %324
        %vm326 = vcmp.eq.f32.partialorder %v323, %v325
        %v327 = vsel %vm326, %v322, inf
        %328 = vmin.xlane.f32.xlu0 %v327
        %v329 = vpop.xlane.xlu0 %328
        %v330 = vcvt.f32.s32 %v329
        %v331 = vcvt.f32.s32 %v325
        %v332 = vshll.u32 %v331, 16
        %v333 = vadd.s32 %v332, %v330
        %v334 = vsel %vm308, %v318, 2147483647
        %v335 = vand.u32 %v334, 65535
        %v336 = vshra.s32 %v334, 16
        %v337 = vcvt.s32.f32 %v335
        %v338 = vcvt.s32.f32 %v336
        %339 = vmin.xlane.f32.xlu0 %v338
        %v340 = vpop.xlane.xlu0 %339
        %vm341 = vcmp.eq.f32.partialorder %v338, %v340
        %v342 = vsel %vm341, %v337, inf
        %343 = vmin.xlane.f32.xlu0 %v342
        %v344 = vpop.xlane.xlu0 %343
        %v345 = vcvt.f32.s32 %v344
        %v346 = vcvt.f32.s32 %v340
        %v347 = vshll.u32 %v346, 16
        %v348 = vadd.s32 %v347, %v345
        %vm349 = vcmp.eq.s32.totalorder %v299, %v333
        %vm350 = vcmp.eq.s32.totalorder %v299, %v348
        %v351 = vsel %vm349, 1, 0
        %v352 = vsel %vm350, 1, 0
        %v353 = vcvt.s32.f32 %v351
        %v354 = vcvt.s32.f32 %v352
        %v356 = vsel %vm308, %v353, 0
        %v359 = vsel %vm308, %v354, 0
        %361 = vmatprep.subr.mxu0 0.0
        %362 = vmatpush1.msra.mxu0 %v240
        %363 = vmatprep.subr.mxu0 0.0
        %364 = vmatpush1.msra.mxu0 %v241
        %365 = vmatprep.subr.mxu0 0.0
        %366 = vmatpush1.msra.mxu0 0.0
        %367 = vmatprep.subr.mxu0 0.0
        %368 = vmatpush1.msra.mxu0 0.0
        %369 = vmatprep.subr.mxu0 0.0
        %370 = vmatpush1.msra.mxu0 0.0
        %371 = vmatprep.subr.mxu0 0.0
        %372 = vmatpush1.msra.mxu0 0.0
        %373 = vmatprep.subr.mxu0 0.0
        %374 = vmatpush1.msra.mxu0 0.0
        %375 = vmatprep.subr.mxu0 0.0
        %376 = vmatpush1.msra.mxu0 0.0
        %377 = vmatprep.subr.mxu0 0.0
        %378 = vmatpush1.msra.mxu0 0.0
        %379 = vmatprep.subr.mxu0 0.0
        %380 = vmatpush1.msra.mxu0 0.0
        %381 = vmatprep.subr.mxu0 0.0
        %382 = vmatpush1.msra.mxu0 0.0
        %383 = vmatprep.subr.mxu0 0.0
        %384 = vmatpush1.msra.mxu0 0.0
        %385 = vmatprep.subr.mxu0 0.0
        %386 = vmatpush1.msra.mxu0 0.0
        %387 = vmatprep.subr.mxu0 0.0
        %388 = vmatpush1.msra.mxu0 0.0
        %389 = vmatprep.subr.mxu0 0.0
        %390 = vmatpush1.msra.mxu0 0.0
        %391 = vmatprep.subr.mxu0 0.0
        %392 = vmatpush1.msra.mxu0 0.0
        %393 = vmatprep.subr.mxu0 0.0
        %394 = vmatpush1.msra.mxu0 0.0
        %395 = vmatprep.subr.mxu0 0.0
        %396 = vmatpush1.msra.mxu0 0.0
        %397 = vmatprep.subr.mxu0 0.0
        %398 = vmatpush1.msra.mxu0 0.0
        %399 = vmatprep.subr.mxu0 0.0
        %400 = vmatpush1.msra.mxu0 0.0
        %401 = vmatprep.subr.mxu0 0.0
        %402 = vmatpush1.msra.mxu0 0.0
        %403 = vmatprep.subr.mxu0 0.0
        %404 = vmatpush1.msra.mxu0 0.0
        %405 = vmatprep.subr.mxu0 0.0
        %406 = vmatpush1.msra.mxu0 0.0
        %407 = vmatprep.subr.mxu0 0.0
        %408 = vmatpush1.msra.mxu0 0.0
        %409 = vmatprep.subr.mxu0 0.0
        %410 = vmatpush1.msra.mxu0 0.0
        %411 = vmatprep.subr.mxu0 0.0
        %412 = vmatpush1.msra.mxu0 0.0
        %413 = vmatprep.subr.mxu0 0.0
        %414 = vmatpush1.msra.mxu0 0.0
        %415 = vmatprep.subr.mxu0 0.0
        %416 = vmatpush1.msra.mxu0 0.0
        %417 = vmatprep.subr.mxu0 0.0
        %418 = vmatpush1.msra.mxu0 0.0
        %419 = vmatprep.subr.mxu0 0.0
        %420 = vmatpush1.msra.mxu0 0.0
        %421 = vmatprep.subr.mxu0 0.0
        %422 = vmatpush1.msra.mxu0 0.0
        %423 = vmatprep.subr.mxu0 0.0
        %424 = vmatpush1.msra.mxu0 0.0
        %425 = vmatprep.mubr.f32.mxu0 0.0
        %426 = vmatmul.mubr.f32.gmra.mrb[0].mxu0 %v356
        %v427 = vpop.f32.mrb[0].mxu0
        %v428 = vadd.f32 0.0, %v427
        %v429 = vpop.f32.mrb[0].mxu0
        %430 = vmatprep.mubr.f32.mxu0 0.0
        %431 = vmatmul.mubr.f32.gmra.mrb[0].mxu0 %v359
        %v432 = vpop.f32.mrb[0].mxu0
        %v433 = vadd.f32 0.0, %v432
        %v434 = vpop.f32.mrb[0].mxu0
        %435 = vdwg.mxu0
        %v436 = vmax.f32 %v306, %v428
        %v437 = vmax.f32 %v307, %v433
        %v438 = vsel %vm349, inf, %v302
        %v439 = vsel %vm350, inf, %v303
        %v440 = vsel %vm308, %v438, inf
        %441 = vmin.xlane.f32.xlu0 %v440
        %v442 = vpop.xlane.xlu0 %441
        %v443 = vsel %vm308, %v439, inf
        %444 = vmin.xlane.f32.xlu0 %v443
        %v445 = vpop.xlane.xlu0 %444
        %vm446 = vcmp.le.f32.partialorder %v438, %v442
        %vm447 = vcmp.le.f32.partialorder %v439, %v445
        %v448 = vsel %vm446, %v299, 16
        %v449 = vsel %vm447, %v299, 16
        %v450 = vsel %vm308, %v448, 2147483647
        %v451 = vand.u32 %v450, 65535
        %v452 = vshra.s32 %v450, 16
        %v453 = vcvt.s32.f32 %v451
        %v454 = vcvt.s32.f32 %v452
        %455 = vmin.xlane.f32.xlu0 %v454
        %v456 = vpop.xlane.xlu0 %455
        %vm457 = vcmp.eq.f32.partialorder %v454, %v456
        %v458 = vsel %vm457, %v453, inf
        %459 = vmin.xlane.f32.xlu0 %v458
        %v460 = vpop.xlane.xlu0 %459
        %v461 = vcvt.f32.s32 %v460
        %v462 = vcvt.f32.s32 %v456
        %v463 = vshll.u32 %v462, 16
        %v464 = vadd.s32 %v463, %v461
        %v465 = vsel %vm308, %v449, 2147483647
        %v466 = vand.u32 %v465, 65535
        %v467 = vshra.s32 %v465, 16
        %v468 = vcvt.s32.f32 %v466
        %v469 = vcvt.s32.f32 %v467
        %470 = vmin.xlane.f32.xlu0 %v469
        %v471 = vpop.xlane.xlu0 %470
        %vm472 = vcmp.eq.f32.partialorder %v469, %v471
        %v473 = vsel %vm472, %v468, inf
        %474 = vmin.xlane.f32.xlu0 %v473
        %v475 = vpop.xlane.xlu0 %474
        %v476 = vcvt.f32.s32 %v475
        %v477 = vcvt.f32.s32 %v471
        %v478 = vshll.u32 %v477, 16
        %v479 = vadd.s32 %v478, %v476
        %vm480 = vcmp.eq.s32.totalorder %v299, %v464
        %vm481 = vcmp.eq.s32.totalorder %v299, %v479
        %v482 = vsel %vm480, 1, 0
        %v483 = vsel %vm481, 1, 0
        %v484 = vcvt.s32.f32 %v482
        %v485 = vcvt.s32.f32 %v483
        %v487 = vsel %vm308, %v484, 0
        %v490 = vsel %vm308, %v485, 0
        %492 = vmatprep.subr.mxu0 0.0
        %493 = vmatpush1.msra.mxu0 %v240
        %494 = vmatprep.subr.mxu0 0.0
        %495 = vmatpush1.msra.mxu0 %v241
        %496 = vmatprep.subr.mxu0 0.0
        %497 = vmatpush1.msra.mxu0 0.0
        %498 = vmatprep.subr.mxu0 0.0
        %499 = vmatpush1.msra.mxu0 0.0
        %500 = vmatprep.subr.mxu0 0.0
        %501 = vmatpush1.msra.mxu0 0.0
        %502 = vmatprep.subr.mxu0 0.0
        %503 = vmatpush1.msra.mxu0 0.0
        %504 = vmatprep.subr.mxu0 0.0
        %505 = vmatpush1.msra.mxu0 0.0
        %506 = vmatprep.subr.mxu0 0.0
        %507 = vmatpush1.msra.mxu0 0.0
        %508 = vmatprep.subr.mxu0 0.0
        %509 = vmatpush1.msra.mxu0 0.0
        %510 = vmatprep.subr.mxu0 0.0
        %511 = vmatpush1.msra.mxu0 0.0
        %512 = vmatprep.subr.mxu0 0.0
        %513 = vmatpush1.msra.mxu0 0.0
        %514 = vmatprep.subr.mxu0 0.0
        %515 = vmatpush1.msra.mxu0 0.0
        %516 = vmatprep.subr.mxu0 0.0
        %517 = vmatpush1.msra.mxu0 0.0
        %518 = vmatprep.subr.mxu0 0.0
        %519 = vmatpush1.msra.mxu0 0.0
        %520 = vmatprep.subr.mxu0 0.0
        %521 = vmatpush1.msra.mxu0 0.0
        %522 = vmatprep.subr.mxu0 0.0
        %523 = vmatpush1.msra.mxu0 0.0
        %524 = vmatprep.subr.mxu0 0.0
        %525 = vmatpush1.msra.mxu0 0.0
        %526 = vmatprep.subr.mxu0 0.0
        %527 = vmatpush1.msra.mxu0 0.0
        %528 = vmatprep.subr.mxu0 0.0
        %529 = vmatpush1.msra.mxu0 0.0
        %530 = vmatprep.subr.mxu0 0.0
        %531 = vmatpush1.msra.mxu0 0.0
        %532 = vmatprep.subr.mxu0 0.0
        %533 = vmatpush1.msra.mxu0 0.0
        %534 = vmatprep.subr.mxu0 0.0
        %535 = vmatpush1.msra.mxu0 0.0
        %536 = vmatprep.subr.mxu0 0.0
        %537 = vmatpush1.msra.mxu0 0.0
        %538 = vmatprep.subr.mxu0 0.0
        %539 = vmatpush1.msra.mxu0 0.0
        %540 = vmatprep.subr.mxu0 0.0
        %541 = vmatpush1.msra.mxu0 0.0
        %542 = vmatprep.subr.mxu0 0.0
        %543 = vmatpush1.msra.mxu0 0.0
        %544 = vmatprep.subr.mxu0 0.0
        %545 = vmatpush1.msra.mxu0 0.0
        %546 = vmatprep.subr.mxu0 0.0
        %547 = vmatpush1.msra.mxu0 0.0
        %548 = vmatprep.subr.mxu0 0.0
        %549 = vmatpush1.msra.mxu0 0.0
        %550 = vmatprep.subr.mxu0 0.0
        %551 = vmatpush1.msra.mxu0 0.0
        %552 = vmatprep.subr.mxu0 0.0
        %553 = vmatpush1.msra.mxu0 0.0
        %554 = vmatprep.subr.mxu0 0.0
        %555 = vmatpush1.msra.mxu0 0.0
        %556 = vmatprep.mubr.f32.mxu0 0.0
        %557 = vmatmul.mubr.f32.gmra.mrb[0].mxu0 %v487
        %v558 = vpop.f32.mrb[0].mxu0
        %v559 = vadd.f32 0.0, %v558
        %v560 = vpop.f32.mrb[0].mxu0
        %561 = vmatprep.mubr.f32.mxu0 0.0
        %562 = vmatmul.mubr.f32.gmra.mrb[0].mxu0 %v490
        %v563 = vpop.f32.mrb[0].mxu0
        %v564 = vadd.f32 0.0, %v563
        %v565 = vpop.f32.mrb[0].mxu0
        %566 = vdwg.mxu0
        %v567 = vmax.f32 %v436, %v559
        %v568 = vmax.f32 %v437, %v564
        %v569 = vsel %vm480, inf, %v438
        %v570 = vsel %vm481, inf, %v439
        %v571 = vsel %vm308, %v569, inf
        %572 = vmin.xlane.f32.xlu0 %v571
        %v573 = vpop.xlane.xlu0 %572
        %v574 = vsel %vm308, %v570, inf
        %575 = vmin.xlane.f32.xlu0 %v574
        %v576 = vpop.xlane.xlu0 %575
        %vm577 = vcmp.le.f32.partialorder %v569, %v573
        %vm578 = vcmp.le.f32.partialorder %v570, %v576
        %v579 = vsel %vm577, %v299, 16
        %v580 = vsel %vm578, %v299, 16
        %v581 = vsel %vm308, %v579, 2147483647
        %v582 = vand.u32 %v581, 65535
        %v583 = vshra.s32 %v581, 16
        %v584 = vcvt.s32.f32 %v582
        %v585 = vcvt.s32.f32 %v583
        %586 = vmin.xlane.f32.xlu0 %v585
        %v587 = vpop.xlane.xlu0 %586
        %vm588 = vcmp.eq.f32.partialorder %v585, %v587
        %v589 = vsel %vm588, %v584, inf
        %590 = vmin.xlane.f32.xlu0 %v589
        %v591 = vpop.xlane.xlu0 %590
        %v592 = vcvt.f32.s32 %v591
        %v593 = vcvt.f32.s32 %v587
        %v594 = vshll.u32 %v593, 16
        %v595 = vadd.s32 %v594, %v592
        %v596 = vsel %vm308, %v580, 2147483647
        %v597 = vand.u32 %v596, 65535
        %v598 = vshra.s32 %v596, 16
        %v599 = vcvt.s32.f32 %v597
        %v600 = vcvt.s32.f32 %v598
        %601 = vmin.xlane.f32.xlu0 %v600
        %v602 = vpop.xlane.xlu0 %601
        %vm603 = vcmp.eq.f32.partialorder %v600, %v602
        %v604 = vsel %vm603, %v599, inf
        %605 = vmin.xlane.f32.xlu0 %v604
        %v606 = vpop.xlane.xlu0 %605
        %v607 = vcvt.f32.s32 %v606
        %v608 = vcvt.f32.s32 %v602
        %v609 = vshll.u32 %v608, 16
        %v610 = vadd.s32 %v609, %v607
        %vm611 = vcmp.eq.s32.totalorder %v299, %v595
        %vm612 = vcmp.eq.s32.totalorder %v299, %v610
        %v613 = vsel %vm611, 1, 0
        %v614 = vsel %vm612, 1, 0
        %v615 = vcvt.s32.f32 %v613
        %v616 = vcvt.s32.f32 %v614
        %v618 = vsel %vm308, %v615, 0
        %v621 = vsel %vm308, %v616, 0
        %623 = vmatprep.subr.mxu0 0.0
        %624 = vmatpush1.msra.mxu0 %v240
        %625 = vmatprep.subr.mxu0 0.0
        %626 = vmatpush1.msra.mxu0 %v241
        %627 = vmatprep.subr.mxu0 0.0
        %628 = vmatpush1.msra.mxu0 0.0
        %629 = vmatprep.subr.mxu0 0.0
        %630 = vmatpush1.msra.mxu0 0.0
        %631 = vmatprep.subr.mxu0 0.0
        %632 = vmatpush1.msra.mxu0 0.0
        %633 = vmatprep.subr.mxu0 0.0
        %634 = vmatpush1.msra.mxu0 0.0
        %635 = vmatprep.subr.mxu0 0.0
        %636 = vmatpush1.msra.mxu0 0.0
        %637 = vmatprep.subr.mxu0 0.0
        %638 = vmatpush1.msra.mxu0 0.0
        %639 = vmatprep.subr.mxu0 0.0
        %640 = vmatpush1.msra.mxu0 0.0
        %641 = vmatprep.subr.mxu0 0.0
        %642 = vmatpush1.msra.mxu0 0.0
        %643 = vmatprep.subr.mxu0 0.0
        %644 = vmatpush1.msra.mxu0 0.0
        %645 = vmatprep.subr.mxu0 0.0
        %646 = vmatpush1.msra.mxu0 0.0
        %647 = vmatprep.subr.mxu0 0.0
        %648 = vmatpush1.msra.mxu0 0.0
        %649 = vmatprep.subr.mxu0 0.0
        %650 = vmatpush1.msra.mxu0 0.0
        %651 = vmatprep.subr.mxu0 0.0
        %652 = vmatpush1.msra.mxu0 0.0
        %653 = vmatprep.subr.mxu0 0.0
        %654 = vmatpush1.msra.mxu0 0.0
        %655 = vmatprep.subr.mxu0 0.0
        %656 = vmatpush1.msra.mxu0 0.0
        %657 = vmatprep.subr.mxu0 0.0
        %658 = vmatpush1.msra.mxu0 0.0
        %659 = vmatprep.subr.mxu0 0.0
        %660 = vmatpush1.msra.mxu0 0.0
        %661 = vmatprep.subr.mxu0 0.0
        %662 = vmatpush1.msra.mxu0 0.0
        %663 = vmatprep.subr.mxu0 0.0
        %664 = vmatpush1.msra.mxu0 0.0
        %665 = vmatprep.subr.mxu0 0.0
        %666 = vmatpush1.msra.mxu0 0.0
        %667 = vmatprep.subr.mxu0 0.0
        %668 = vmatpush1.msra.mxu0 0.0
        %669 = vmatprep.subr.mxu0 0.0
        %670 = vmatpush1.msra.mxu0 0.0
        %671 = vmatprep.subr.mxu0 0.0
        %672 = vmatpush1.msra.mxu0 0.0
        %673 = vmatprep.subr.mxu0 0.0
        %674 = vmatpush1.msra.mxu0 0.0
        %675 = vmatprep.subr.mxu0 0.0
        %676 = vmatpush1.msra.mxu0 0.0
        %677 = vmatprep.subr.mxu0 0.0
        %678 = vmatpush1.msra.mxu0 0.0
        %679 = vmatprep.subr.mxu0 0.0
        %680 = vmatpush1.msra.mxu0 0.0
        %681 = vmatprep.subr.mxu0 0.0
        %682 = vmatpush1.msra.mxu0 0.0
        %683 = vmatprep.subr.mxu0 0.0
        %684 = vmatpush1.msra.mxu0 0.0
        %685 = vmatprep.subr.mxu0 0.0
        %686 = vmatpush1.msra.mxu0 0.0
        %687 = vmatprep.mubr.f32.mxu0 0.0
        %688 = vmatmul.mubr.f32.gmra.mrb[0].mxu0 %v618
        %v689 = vpop.f32.mrb[0].mxu0
        %v690 = vadd.f32 0.0, %v689
        %v691 = vpop.f32.mrb[0].mxu0
        %692 = vmatprep.mubr.f32.mxu0 0.0
        %693 = vmatmul.mubr.f32.gmra.mrb[0].mxu0 %v621
        %v694 = vpop.f32.mrb[0].mxu0
        %v695 = vadd.f32 0.0, %v694
        %v696 = vpop.f32.mrb[0].mxu0
        %697 = vdwg.mxu0
        %v698 = vmax.f32 %v567, %v690
        %v699 = vmax.f32 %v568, %v695
        %v700 = vsel %vm611, inf, %v569
        %v701 = vsel %vm612, inf, %v570
        %v702 = vsel %vm308, %v700, inf
        %703 = vmin.xlane.f32.xlu0 %v702
        %v704 = vpop.xlane.xlu0 %703
        %v705 = vsel %vm308, %v701, inf
        %706 = vmin.xlane.f32.xlu0 %v705
        %v707 = vpop.xlane.xlu0 %706
        %vm708 = vcmp.le.f32.partialorder %v700, %v704
        %vm709 = vcmp.le.f32.partialorder %v701, %v707
        %v710 = vsel %vm708, %v299, 16
        %v711 = vsel %vm709, %v299, 16
        %v712 = vsel %vm308, %v710, 2147483647
        %v713 = vand.u32 %v712, 65535
        %v714 = vshra.s32 %v712, 16
        %v715 = vcvt.s32.f32 %v713
        %v716 = vcvt.s32.f32 %v714
        %717 = vmin.xlane.f32.xlu0 %v716
        %v718 = vpop.xlane.xlu0 %717
        %vm719 = vcmp.eq.f32.partialorder %v716, %v718
        %v720 = vsel %vm719, %v715, inf
        %721 = vmin.xlane.f32.xlu0 %v720
        %v722 = vpop.xlane.xlu0 %721
        %v723 = vcvt.f32.s32 %v722
        %v724 = vcvt.f32.s32 %v718
        %v725 = vshll.u32 %v724, 16
        %v726 = vadd.s32 %v725, %v723
        %v727 = vsel %vm308, %v711, 2147483647
        %v728 = vand.u32 %v727, 65535
        %v729 = vshra.s32 %v727, 16
        %v730 = vcvt.s32.f32 %v728
        %v731 = vcvt.s32.f32 %v729
        %732 = vmin.xlane.f32.xlu0 %v731
        %v733 = vpop.xlane.xlu0 %732
        %vm734 = vcmp.eq.f32.partialorder %v731, %v733
        %v735 = vsel %vm734, %v730, inf
        %736 = vmin.xlane.f32.xlu0 %v735
        %v737 = vpop.xlane.xlu0 %736
        %v738 = vcvt.f32.s32 %v737
        %v739 = vcvt.f32.s32 %v733
        %v740 = vshll.u32 %v739, 16
        %v741 = vadd.s32 %v740, %v738
        %vm742 = vcmp.eq.s32.totalorder %v299, %v726
        %vm743 = vcmp.eq.s32.totalorder %v299, %v741
        %v744 = vsel %vm742, 1, 0
        %v745 = vsel %vm743, 1, 0
        %v746 = vcvt.s32.f32 %v744
        %v747 = vcvt.s32.f32 %v745
        %v749 = vsel %vm308, %v746, 0
        %v752 = vsel %vm308, %v747, 0
        %754 = vmatprep.subr.mxu0 0.0
        %755 = vmatpush1.msra.mxu0 %v240
        %756 = vmatprep.subr.mxu0 0.0
        %757 = vmatpush1.msra.mxu0 %v241
        %758 = vmatprep.subr.mxu0 0.0
        %759 = vmatpush1.msra.mxu0 0.0
        %760 = vmatprep.subr.mxu0 0.0
        %761 = vmatpush1.msra.mxu0 0.0
        %762 = vmatprep.subr.mxu0 0.0
        %763 = vmatpush1.msra.mxu0 0.0
        %764 = vmatprep.subr.mxu0 0.0
        %765 = vmatpush1.msra.mxu0 0.0
        %766 = vmatprep.subr.mxu0 0.0
        %767 = vmatpush1.msra.mxu0 0.0
        %768 = vmatprep.subr.mxu0 0.0
        %769 = vmatpush1.msra.mxu0 0.0
        %770 = vmatprep.subr.mxu0 0.0
        %771 = vmatpush1.msra.mxu0 0.0
        %772 = vmatprep.subr.mxu0 0.0
        %773 = vmatpush1.msra.mxu0 0.0
        %774 = vmatprep.subr.mxu0 0.0
        %775 = vmatpush1.msra.mxu0 0.0
        %776 = vmatprep.subr.mxu0 0.0
        %777 = vmatpush1.msra.mxu0 0.0
        %778 = vmatprep.subr.mxu0 0.0
        %779 = vmatpush1.msra.mxu0 0.0
        %780 = vmatprep.subr.mxu0 0.0
        %781 = vmatpush1.msra.mxu0 0.0
        %782 = vmatprep.subr.mxu0 0.0
        %783 = vmatpush1.msra.mxu0 0.0
        %784 = vmatprep.subr.mxu0 0.0
        %785 = vmatpush1.msra.mxu0 0.0
        %786 = vmatprep.subr.mxu0 0.0
        %787 = vmatpush1.msra.mxu0 0.0
        %788 = vmatprep.subr.mxu0 0.0
        %789 = vmatpush1.msra.mxu0 0.0
        %790 = vmatprep.subr.mxu0 0.0
        %791 = vmatpush1.msra.mxu0 0.0
        %792 = vmatprep.subr.mxu0 0.0
        %793 = vmatpush1.msra.mxu0 0.0
        %794 = vmatprep.subr.mxu0 0.0
        %795 = vmatpush1.msra.mxu0 0.0
        %796 = vmatprep.subr.mxu0 0.0
        %797 = vmatpush1.msra.mxu0 0.0
        %798 = vmatprep.subr.mxu0 0.0
        %799 = vmatpush1.msra.mxu0 0.0
        %800 = vmatprep.subr.mxu0 0.0
        %801 = vmatpush1.msra.mxu0 0.0
        %802 = vmatprep.subr.mxu0 0.0
        %803 = vmatpush1.msra.mxu0 0.0
        %804 = vmatprep.subr.mxu0 0.0
        %805 = vmatpush1.msra.mxu0 0.0
        %806 = vmatprep.subr.mxu0 0.0
        %807 = vmatpush1.msra.mxu0 0.0
        %808 = vmatprep.subr.mxu0 0.0
        %809 = vmatpush1.msra.mxu0 0.0
        %810 = vmatprep.subr.mxu0 0.0
        %811 = vmatpush1.msra.mxu0 0.0
        %812 = vmatprep.subr.mxu0 0.0
        %813 = vmatpush1.msra.mxu0 0.0
        %814 = vmatprep.subr.mxu0 0.0
        %815 = vmatpush1.msra.mxu0 0.0
        %816 = vmatprep.subr.mxu0 0.0
        %817 = vmatpush1.msra.mxu0 0.0
        %818 = vmatprep.mubr.f32.mxu0 0.0
        %819 = vmatmul.mubr.f32.gmra.mrb[0].mxu0 %v749
        %v820 = vpop.f32.mrb[0].mxu0
        %v821 = vadd.f32 0.0, %v820
        %v822 = vpop.f32.mrb[0].mxu0
        %823 = vmatprep.mubr.f32.mxu0 0.0
        %824 = vmatmul.mubr.f32.gmra.mrb[0].mxu0 %v752
        %v825 = vpop.f32.mrb[0].mxu0
        %v826 = vadd.f32 0.0, %v825
        %v827 = vpop.f32.mrb[0].mxu0
        %828 = vdwg.mxu0
        %v829 = vmax.f32 %v698, %v821
        %v830 = vmax.f32 %v699, %v826
        %831 = vst [vmem:[%s216] sm:$0xff] %v829
        %832 = vst [vmem:[%s216 + $0x8] sm:$0xff] %v830
        %s833 = sand.u32 %s119, 1
        %s834 = scalar_lea.sflag [#allocation3], %s833
        %s835 = sand.u32 %s119, 1
        %s836 = smul.addr %s835, 16
        %s837 = scalar_lea.vmem [#allocation2], %s836
        // Predicated region
        $region33: #{tpu_custom_call.1} parent=31 // pred_check
          %p838 = pneg %p129
        $region34: #{tpu_custom_call.1} parent=31 // pred_check_branch
          %840 = sbr.rel (%p838) target = $region36
        $region35: #{tpu_custom_call.1} parent=31 // pred_region
          %s841 = smul.u32 2, %s22
          %s843 = ssub.s32 256, 256
          %844 = vsyncadd %s834, %s843
          %s845 = smul.addr %s21, 2
          %s846 = sadd.s32 %s841, %s845
          %s847 = smul.addr %s846, 128
          %s848 = scalar_lea.hbm %s3, %s847
          %s849 = sshll.u32 %s837, 4
          %s850 = int_to_ptr.vmem [resolvable:$true] %s849
          %855 = dma.vmem_to_hbm [thread:$0]  %s850, 256, %s848, %s834, 128, 128, 8
        $region36: #{tpu_custom_call.1} parent=31 // pred_fallthru
          _
      $region32: #{tpu_custom_call.1} parent=5 // pred_fallthru
        _
      %p856 = scmp.le.s32.totalorder 2, %s12
      // Predicated region
      $region37: #{tpu_custom_call.1} parent=5 // pred_check
        %p857 = pneg %p856
      $region38: #{tpu_custom_call.1} parent=5 // pred_check_branch
        %859 = sbr.rel (%p857) target = $region40
      $region39: #{tpu_custom_call.1} parent=5 // pred_region
        %s860 = ssub.s32 %s12, 2
        // Predicated region
        $region41: #{tpu_custom_call.1} parent=39 // pred_check
          %p861 = pneg %p135
        $region42: #{tpu_custom_call.1} parent=39 // pred_check_branch
          %863 = sbr.rel (%p861) target = $region44
        $region43: #{tpu_custom_call.1} parent=39 // pred_region
          %s864 = sand.u32 %s120, 1
          %s865 = scalar_lea.sflag [#allocation3], %s864
          %s866 = sand.u32 %s120, 1
          %s867 = smul.addr %s866, 16
          %s868 = scalar_lea.vmem [#allocation2], %s867
          %869 = dma.done %s865, 256
        $region44: #{tpu_custom_call.1} parent=39 // pred_fallthru
          _
      $region40: #{tpu_custom_call.1} parent=5 // pred_fallthru
        _
    $region6: #{tpu_custom_call.1} parent=1 // loop_footer
      %s16 = sadd.s32 1, %s12
    $region7: #{tpu_custom_call.1} parent=1 // loop_footer_branch
      %11 = sbr.rel target = $region3
    $region8: #{tpu_custom_call.1} parent=1 // loop_exit
      _
    %870 = vsyncpa [#allocation3], 1
    %s871 = scalar_lea.sflag [#allocation3], 1
    %872 = vsyncpa %s871, 1

</llo_original>
